<compile_context>
chip_gen: v6e
topology: v6e:2x2x1
jax: 0.10.0
libtpu: 0.0.40
codegen_flags: <defaults>
</compile_context>

<pallas_src>
import math

import jax
import jax.numpy as jnp
from jax import lax
from jax.experimental import pallas as pl
from jax.experimental.pallas import tpu as pltpu


def _embed_action_kernel(inp_ref, emb_ref, out_ref):
    # inp_ref: (bs, num_ins) in VMEM (action index in column 0)
    # emb_ref: (num_actions, latent_dim) f32
    # out_ref: (1, bs, latent_dim)
    bs = inp_ref.shape[0]
    num_actions = emb_ref.shape[0]

    # Column-0 slice + cast done in-kernel (no wrapper-side intermediate).
    idx = inp_ref[:, 0:1].astype(jnp.int32)               # (bs, 1)

    # Fold the CFG "zero the unconditional chunk" into the one-hot:
    # torch.chunk(2) -> first ceil(bs/2) rows are unconditional; set their
    # index to -1 so the one-hot row is all zeros and the matmul emits zeros.
    n_uncond = (bs + 1) // 2
    rows = lax.broadcasted_iota(jnp.int32, (bs, 1), 0)     # (bs, 1)
    idx = jnp.where(rows < n_uncond, jnp.int32(-1), idx)   # (bs, 1)

    # Gather via one-hot matmul; precision=HIGHEST keeps the f32 table values
    # exact on bf16-native MXUs (a pure gather must not be truncated).
    classes = lax.broadcasted_iota(jnp.int32, (bs, num_actions), 1)
    onehot = (classes == idx).astype(jnp.float32)           # (bs, num_actions)
    gathered = jnp.dot(
        onehot,
        emb_ref[...],
        preferred_element_type=jnp.float32,
        precision=lax.Precision.HIGHEST,
    )                                                        # (bs, latent_dim)

    # Final (1, bs, latent_dim) layout is produced directly in the kernel.
    out_ref[0] = gathered.astype(out_ref.dtype)


def embed_action_forward(inp, action_embedding):
    """inp: (bs, num_ins) with the action index in column 0.

    Returns (1, bs, latent_dim), matching EmbedAction.forward in eval mode
    with guidance_scale > 1.0 and force_mask=False.
    """
    bs, _ = inp.shape
    _, latent_dim = action_embedding.shape

    # Gridless call: whole-array VMEM blocks, no pipeline machinery.
    return pl.pallas_call(
        _embed_action_kernel,
        out_shape=jax.ShapeDtypeStruct((1, bs, latent_dim), action_embedding.dtype),
        in_specs=[
            pl.BlockSpec(memory_space=pltpu.MemorySpace.VMEM),
            pl.BlockSpec(memory_space=pltpu.MemorySpace.VMEM),
        ],
        out_specs=pl.BlockSpec(memory_space=pltpu.MemorySpace.VMEM),
    )(inp, action_embedding)


def _xavier_uniform(key, shape, dtype=jnp.float32):
    fan_in, fan_out = shape[0], shape[1]
    bound = math.sqrt(6.0 / (fan_in + fan_out))
    return jax.random.uniform(key, shape, dtype=dtype, minval=-bound, maxval=bound)


if __name__ == "__main__":
    key = jax.random.PRNGKey(0)
    k_emb, k_idx = jax.random.split(key)

    num_actions = 12
    latent_dim = 32
    bs = 8  # classifier-free-guidance batch: first half uncond, second half cond

    # Deterministic parameter init (xavier_uniform, as in _reset_parameters).
    action_embedding = _xavier_uniform(k_emb, (num_actions, latent_dim))

    # Example input: (bs, 1) with action class indices in column 0.
    inp = jax.random.randint(k_idx, (bs, 1), 0, num_actions, dtype=jnp.int32)

    out = embed_action_forward(inp, action_embedding)
    out = jax.block_until_ready(out)

    # Reference check in plain JAX (chunk(2) => first ceil(bs/2) rows zeroed).
    n_uncond = (bs + 1) // 2
    ref = action_embedding[inp[:, 0]]
    ref = ref.at[:n_uncond].set(0.0)[None]

    assert out.shape == (1, bs, latent_dim)
    assert jnp.allclose(out, ref, atol=1e-6), "mismatch vs reference"

    print("KERNEL_OK")
</pallas_src>

<mosaic_0001>
module attributes {stable_mosaic.version = 11 : i64} {
  func.func @_embed_action_kernel(%arg0: memref<8x1xi32, #tpu.memory_space<vmem>>, %arg1: memref<12x32xf32, #tpu.memory_space<vmem>>, %arg2: memref<1x8x32xf32, #tpu.memory_space<vmem>>) attributes {dimension_semantics = [], scalar_prefetch = 0 : i64, scratch_operands = 0 : i64, tpu.core_type = #tpu.core_type<tc>} {
    %c0 = arith.constant 0 : index
    %c0_0 = arith.constant 0 : index
    %0 = vector.load %arg0[%c0, %c0_0] : memref<8x1xi32, #tpu.memory_space<vmem>>, vector<8x1xi32>
    %1 = tpu.iota {dimensions = array<i32: 0>} : vector<8x1xi32>
    %c4_i32 = arith.constant 4 : i32
    %2 = vector.broadcast %c4_i32 : i32 to vector<8x1xi32>
    %3 = arith.cmpi slt, %1, %2 : vector<8x1xi32>
    %c-1_i32 = arith.constant -1 : i32
    %4 = vector.broadcast %c-1_i32 : i32 to vector<8x1xi32>
    %5 = arith.select %3, %4, %0 : vector<8x1xi1>, vector<8x1xi32>
    %6 = tpu.iota {dimensions = array<i32: 1>} : vector<8x12xi32>
    %7 = vector.broadcast %5 : vector<8x1xi32> to vector<8x12xi32>
    %8 = arith.cmpi eq, %6, %7 : vector<8x12xi32>
    %9 = arith.extui %8 : vector<8x12xi1> to vector<8x12xi32>
    %10 = arith.sitofp %9 : vector<8x12xi32> to vector<8x12xf32>
    %c0_1 = arith.constant 0 : index
    %c0_2 = arith.constant 0 : index
    %11 = vector.load %arg1[%c0_1, %c0_2] : memref<12x32xf32, #tpu.memory_space<vmem>>, vector<12x32xf32>
    %cst = arith.constant dense<0.000000e+00> : vector<8x32xf32>
    %12 = tpu.matmul %10, %11, %cst {dimension_numbers = #tpu.dot_dimension_numbers<[1], [0], [0], [1], [0, 0, 1, 1], [], []>, precision = #tpu.contract_precision<fp32>} : vector<8x12xf32>, vector<12x32xf32>, vector<8x32xf32> -> vector<8x32xf32>
    %c0_3 = arith.constant 0 : index
    %c0_4 = arith.constant 0 : index
    %c0_5 = arith.constant 0 : index
    %13 = vector.load %arg2[%c0_3, %c0_4, %c0_5] : memref<1x8x32xf32, #tpu.memory_space<vmem>>, vector<1x8x32xf32>
    %14 = vector.shape_cast %13 : vector<1x8x32xf32> to vector<8x32xf32>
    %15 = vector.shape_cast %12 : vector<8x32xf32> to vector<1x8x32xf32>
    tpu.vector_store %arg2[%c0_3, %c0_4, %c0_5], %15 {strides = array<i32>} : memref<1x8x32xf32, #tpu.memory_space<vmem>>, vector<1x8x32xf32>,
    return
  }
}

</mosaic_0001>

<llo_original>
// kernel: tpu_custom_call.1
$region0: #{tpu_custom_call.1}
  #allocation0 [shape = 'u32[]', space=smem, size = 0x4, offset = 0x4, fixed_abs, tag = 'smem constant byte address 0x4 - core index']
  #allocation1 [shape = 'u32[144,128]{1,0:T(1,128)}', space=vmem, size = 0x12000, scoped, tag = 'internal scratch']
  %s0 = inlined_call_operand.vmem [shape: s32[8,1], index: 0, kind: input, shape index: {}]
  %s1 = inlined_call_operand.hbm [shape: f32[12,32], index: 1, kind: input, shape index: {}]
  %s2 = inlined_call_operand.hbm [shape: f32[1,8,32], index: 2, kind: output, shape index: {}]
  %s3 = sld [smem:[#allocation0]]
  $region22: #{tpu_custom_call.1} parent=0
    _
  %s5 = ssub.s32 1, %s3
  %s6 = scalar_select 0, %s5, %s3
  $region1: #{tpu_custom_call.1} parent=0
    #allocation2 [shape = 'u8[8192]{0}', space=vmem, size = 0x2000, scoped, tag = 'input window, operand 1, single buffered']
    #allocation3 [shape = 's32[1]{0}', space=sflag, size = 0x4, scoped, tag = 'scoped memory for tpu_custom_call.1']
    #allocation4 [shape = 's32[1]{0}', space=sflag, size = 0x4, scoped, tag = 'scoped memory for tpu_custom_call.1']
    #allocation5 [shape = 'u8[4096]{0}', space=vmem, size = 0x1000, scoped, tag = 'output window, operand 0, single buffered']
    %7 = vsyncpa [#allocation3], 0
    %8 = vsyncpa [#allocation4], 0
    // Predicated region
    $region2: #{tpu_custom_call.1} parent=1 // pred_check
      _
    $region3: #{tpu_custom_call.1} parent=1 // pred_check_branch
      %10 = sbr.rel (0) target = $region5
    $region4: #{tpu_custom_call.1} parent=1 // pred_region
      _
    $region5: #{tpu_custom_call.1} parent=1 // pred_fallthru
      _
    // Predicated region
    $region6: #{tpu_custom_call.1} parent=1 // pred_check
      _
    $region7: #{tpu_custom_call.1} parent=1 // pred_check_branch
      %12 = sbr.rel (0) target = $region9
    $region8: #{tpu_custom_call.1} parent=1 // pred_region
      %s14 = ssub.s32 256, 256
      %15 = vsyncadd [#allocation3], %s14
      %s16 = sshll.u32 [#allocation2], 4
      %s17 = int_to_ptr.vmem [resolvable:$true] %s16
      %22 = dma.hbm_to_vmem [thread:$0]  %s1, 256, %s17, [#allocation3], 128, 128, 8
    $region9: #{tpu_custom_call.1} parent=1 // pred_fallthru
      _
    // Predicated region
    $region10: #{tpu_custom_call.1} parent=1 // pred_check
      _
    $region11: #{tpu_custom_call.1} parent=1 // pred_check_branch
      %24 = sbr.rel (0) target = $region13
    $region12: #{tpu_custom_call.1} parent=1 // pred_region
      %25 = dma.done [#allocation3], 256
    $region13: #{tpu_custom_call.1} parent=1 // pred_fallthru
      _
    %v26 = vld [vmem:[%s0] sm:$0xff]
    %v27 = vlaneseq
    %v28 = vshrl.u32 %v27, 7
    %vm29 = vcmp.lt.s32.totalorder %v28, 4
    %v30 = vsel %vm29, 4294967295, %v26
    %v31 = vlaneseq
    %v32 = vand.u32 %v31, 127
    %33 = vset.pattern.permute.xlu0 0
    %34 = vperm.xlu0 %33, %v30
    %v35 = vpop.permute.xlu0 %34
    %vm36 = vcmp.eq.s32.totalorder %v32, %v35
    %v37 = vsel %vm36, 1, 0
    %v38 = vcvt.s32.f32 %v37
    %v39 = vld [vmem:[#allocation2] sm:$0xff]
    %v40 = vld [vmem:[#allocation2 + $0x8] sm:$0xf]
    %vm41 = vcmask 97280
    %v43 = vsel %vm41, %v38, 0
    %vm45 = vcmask 1043456
    %v47 = vsel %vm45, %v40, 0
    %49 = vmatprep.subr.mxu0 0.0
    %50 = vmatpush1.msra.mxu0 0.0
    %51 = vmatprep.subr.mxu0 0.0
    %52 = vmatpush1.msra.mxu0 0.0
    %53 = vmatprep.subr.mxu0 0.0
    %54 = vmatpush1.msra.mxu0 0.0
    %55 = vmatprep.subr.mxu0 0.0
    %56 = vmatpush1.msra.mxu0 0.0
    %57 = vmatprep.subr.mxu0 0.0
    %58 = vmatpush1.msra.mxu0 0.0
    %59 = vmatprep.subr.mxu0 0.0
    %60 = vmatpush1.msra.mxu0 0.0
    %61 = vmatprep.subr.mxu0 0.0
    %62 = vmatpush1.msra.mxu0 0.0
    %63 = vmatprep.subr.mxu0 0.0
    %64 = vmatpush1.msra.mxu0 0.0
    %65 = vmatprep.subr.mxu0 0.0
    %66 = vmatpush1.msra.mxu0 0.0
    %67 = vmatprep.subr.mxu0 0.0
    %68 = vmatpush1.msra.mxu0 0.0
    %69 = vmatprep.subr.mxu0 0.0
    %70 = vmatpush1.msra.mxu0 0.0
    %71 = vmatprep.subr.mxu0 0.0
    %72 = vmatpush1.msra.mxu0 0.0
    %73 = vmatprep.subr.mxu0 0.0
    %74 = vmatpush1.msra.mxu0 0.0
    %75 = vmatprep.subr.mxu0 0.0
    %76 = vmatpush1.msra.mxu0 0.0
    %77 = vmatprep.subr.mxu0 0.0
    %v78 = vand.u32 %v47, 4294901760
    %79 = vmatpush1.msra.mxu0 %v78
    %80 = vmatprep.subr.mxu0 0.0
    %v81 = vand.u32 %v39, 4294901760
    %82 = vmatpush1.msra.mxu0 %v81
    %83 = vmatprep.subr.mxu0 0.0
    %84 = vmatpush2.msra.mxu0 0.0
    %85 = vmatprep.subr.mxu0 0.0
    %86 = vmatpush2.msra.mxu0 0.0
    %87 = vmatprep.subr.mxu0 0.0
    %88 = vmatpush2.msra.mxu0 0.0
    %89 = vmatprep.subr.mxu0 0.0
    %90 = vmatpush2.msra.mxu0 0.0
    %91 = vmatprep.subr.mxu0 0.0
    %92 = vmatpush2.msra.mxu0 0.0
    %93 = vmatprep.subr.mxu0 0.0
    %94 = vmatpush2.msra.mxu0 0.0
    %95 = vmatprep.subr.mxu0 0.0
    %96 = vmatpush2.msra.mxu0 0.0
    %97 = vmatprep.subr.mxu0 0.0
    %98 = vmatpush2.msra.mxu0 0.0
    %99 = vmatprep.subr.mxu0 0.0
    %100 = vmatpush2.msra.mxu0 0.0
    %101 = vmatprep.subr.mxu0 0.0
    %102 = vmatpush2.msra.mxu0 0.0
    %103 = vmatprep.subr.mxu0 0.0
    %104 = vmatpush2.msra.mxu0 0.0
    %105 = vmatprep.subr.mxu0 0.0
    %106 = vmatpush2.msra.mxu0 0.0
    %107 = vmatprep.subr.mxu0 0.0
    %108 = vmatpush2.msra.mxu0 0.0
    %109 = vmatprep.subr.mxu0 0.0
    %110 = vmatpush2.msra.mxu0 0.0
    %111 = vmatprep.subr.mxu0 0.0
    %112 = vmatpush2.msra.mxu0 0.0
    %113 = vmatprep.subr.mxu0 0.0
    %114 = vmatpush2.msra.mxu0 0.0
    %115 = vmatprep.mubr.f32.mxu0 0.0
    %v116 = vand.u32 %v43, 4294901760
    %v117 = vsub.f32 %v43, %v116
    %v118 = vand.u32 %v117, 4294901760
    %v119 = vsub.f32 %v117, %v118
    %v120 = vand.u32 %v119, 4294901760
    %121 = vmatmul.mubr.f32.gmra.mxu0 %v120
    %v122 = vpop.f32.mrf.mxu0
    %v123 = vadd.f32 0.0, %v122
    %v124 = vpop.f32.mrf.mxu0
    %125 = vdwg.mxu0
    %126 = vmatprep.subr.mxu0 0.0
    %127 = vmatpush1.msra.mxu0 0.0
    %128 = vmatprep.subr.mxu0 0.0
    %129 = vmatpush1.msra.mxu0 0.0
    %130 = vmatprep.subr.mxu0 0.0
    %131 = vmatpush1.msra.mxu0 0.0
    %132 = vmatprep.subr.mxu0 0.0
    %133 = vmatpush1.msra.mxu0 0.0
    %134 = vmatprep.subr.mxu0 0.0
    %135 = vmatpush1.msra.mxu0 0.0
    %136 = vmatprep.subr.mxu0 0.0
    %137 = vmatpush1.msra.mxu0 0.0
    %138 = vmatprep.subr.mxu0 0.0
    %139 = vmatpush1.msra.mxu0 0.0
    %140 = vmatprep.subr.mxu0 0.0
    %141 = vmatpush1.msra.mxu0 0.0
    %142 = vmatprep.subr.mxu0 0.0
    %143 = vmatpush1.msra.mxu0 0.0
    %144 = vmatprep.subr.mxu0 0.0
    %145 = vmatpush1.msra.mxu0 0.0
    %146 = vmatprep.subr.mxu0 0.0
    %147 = vmatpush1.msra.mxu0 0.0
    %148 = vmatprep.subr.mxu0 0.0
    %149 = vmatpush1.msra.mxu0 0.0
    %150 = vmatprep.subr.mxu0 0.0
    %151 = vmatpush1.msra.mxu0 0.0
    %152 = vmatprep.subr.mxu0 0.0
    %153 = vmatpush1.msra.mxu0 0.0
    %154 = vmatprep.subr.mxu0 0.0
    %v155 = vand.u32 %v47, 4294901760
    %v156 = vsub.f32 %v47, %v155
    %v157 = vand.u32 %v156, 4294901760
    %v158 = vsub.f32 %v156, %v157
    %v159 = vand.u32 %v158, 4294901760
    %160 = vmatpush1.msra.mxu0 %v159
    %161 = vmatprep.subr.mxu0 0.0
    %v162 = vand.u32 %v39, 4294901760
    %v163 = vsub.f32 %v39, %v162
    %v164 = vand.u32 %v163, 4294901760
    %v165 = vsub.f32 %v163, %v164
    %v166 = vand.u32 %v165, 4294901760
    %167 = vmatpush1.msra.mxu0 %v166
    %168 = vmatprep.subr.mxu0 0.0
    %169 = vmatpush2.msra.mxu0 0.0
    %170 = vmatprep.subr.mxu0 0.0
    %171 = vmatpush2.msra.mxu0 0.0
    %172 = vmatprep.subr.mxu0 0.0
    %173 = vmatpush2.msra.mxu0 0.0
    %174 = vmatprep.subr.mxu0 0.0
    %175 = vmatpush2.msra.mxu0 0.0
    %176 = vmatprep.subr.mxu0 0.0
    %177 = vmatpush2.msra.mxu0 0.0
    %178 = vmatprep.subr.mxu0 0.0
    %179 = vmatpush2.msra.mxu0 0.0
    %180 = vmatprep.subr.mxu0 0.0
    %181 = vmatpush2.msra.mxu0 0.0
    %182 = vmatprep.subr.mxu0 0.0
    %183 = vmatpush2.msra.mxu0 0.0
    %184 = vmatprep.subr.mxu0 0.0
    %185 = vmatpush2.msra.mxu0 0.0
    %186 = vmatprep.subr.mxu0 0.0
    %187 = vmatpush2.msra.mxu0 0.0
    %188 = vmatprep.subr.mxu0 0.0
    %189 = vmatpush2.msra.mxu0 0.0
    %190 = vmatprep.subr.mxu0 0.0
    %191 = vmatpush2.msra.mxu0 0.0
    %192 = vmatprep.subr.mxu0 0.0
    %193 = vmatpush2.msra.mxu0 0.0
    %194 = vmatprep.subr.mxu0 0.0
    %195 = vmatpush2.msra.mxu0 0.0
    %196 = vmatprep.subr.mxu0 0.0
    %197 = vmatpush2.msra.mxu0 0.0
    %198 = vmatprep.subr.mxu0 0.0
    %199 = vmatpush2.msra.mxu0 0.0
    %200 = vmatprep.mubr.f32.mxu0 0.0
    %v201 = vand.u32 %v43, 4294901760
    %202 = vmatmul.mubr.f32.gmra.mxu0 %v201
    %v203 = vpop.f32.mrf.mxu0
    %v204 = vadd.f32 %v123, %v203
    %v205 = vpop.f32.mrf.mxu0
    %206 = vdwg.mxu0
    %207 = vmatprep.subr.mxu0 0.0
    %208 = vmatpush1.msra.mxu0 0.0
    %209 = vmatprep.subr.mxu0 0.0
    %210 = vmatpush1.msra.mxu0 0.0
    %211 = vmatprep.subr.mxu0 0.0
    %212 = vmatpush1.msra.mxu0 0.0
    %213 = vmatprep.subr.mxu0 0.0
    %214 = vmatpush1.msra.mxu0 0.0
    %215 = vmatprep.subr.mxu0 0.0
    %216 = vmatpush1.msra.mxu0 0.0
    %217 = vmatprep.subr.mxu0 0.0
    %218 = vmatpush1.msra.mxu0 0.0
    %219 = vmatprep.subr.mxu0 0.0
    %220 = vmatpush1.msra.mxu0 0.0
    %221 = vmatprep.subr.mxu0 0.0
    %222 = vmatpush1.msra.mxu0 0.0
    %223 = vmatprep.subr.mxu0 0.0
    %224 = vmatpush1.msra.mxu0 0.0
    %225 = vmatprep.subr.mxu0 0.0
    %226 = vmatpush1.msra.mxu0 0.0
    %227 = vmatprep.subr.mxu0 0.0
    %228 = vmatpush1.msra.mxu0 0.0
    %229 = vmatprep.subr.mxu0 0.0
    %230 = vmatpush1.msra.mxu0 0.0
    %231 = vmatprep.subr.mxu0 0.0
    %232 = vmatpush1.msra.mxu0 0.0
    %233 = vmatprep.subr.mxu0 0.0
    %234 = vmatpush1.msra.mxu0 0.0
    %235 = vmatprep.subr.mxu0 0.0
    %v236 = vand.u32 %v47, 4294901760
    %v237 = vsub.f32 %v47, %v236
    %238 = vmatpush1.msra.mxu0 %v237
    %239 = vmatprep.subr.mxu0 0.0
    %v240 = vand.u32 %v39, 4294901760
    %v241 = vsub.f32 %v39, %v240
    %242 = vmatpush1.msra.mxu0 %v241
    %243 = vmatprep.subr.mxu0 0.0
    %244 = vmatpush2.msra.mxu0 0.0
    %245 = vmatprep.subr.mxu0 0.0
    %246 = vmatpush2.msra.mxu0 0.0
    %247 = vmatprep.subr.mxu0 0.0
    %248 = vmatpush2.msra.mxu0 0.0
    %249 = vmatprep.subr.mxu0 0.0
    %250 = vmatpush2.msra.mxu0 0.0
    %251 = vmatprep.subr.mxu0 0.0
    %252 = vmatpush2.msra.mxu0 0.0
    %253 = vmatprep.subr.mxu0 0.0
    %254 = vmatpush2.msra.mxu0 0.0
    %255 = vmatprep.subr.mxu0 0.0
    %256 = vmatpush2.msra.mxu0 0.0
    %257 = vmatprep.subr.mxu0 0.0
    %258 = vmatpush2.msra.mxu0 0.0
    %259 = vmatprep.subr.mxu0 0.0
    %260 = vmatpush2.msra.mxu0 0.0
    %261 = vmatprep.subr.mxu0 0.0
    %262 = vmatpush2.msra.mxu0 0.0
    %263 = vmatprep.subr.mxu0 0.0
    %264 = vmatpush2.msra.mxu0 0.0
    %265 = vmatprep.subr.mxu0 0.0
    %266 = vmatpush2.msra.mxu0 0.0
    %267 = vmatprep.subr.mxu0 0.0
    %268 = vmatpush2.msra.mxu0 0.0
    %269 = vmatprep.subr.mxu0 0.0
    %270 = vmatpush2.msra.mxu0 0.0
    %271 = vmatprep.subr.mxu0 0.0
    %272 = vmatpush2.msra.mxu0 0.0
    %273 = vmatprep.subr.mxu0 0.0
    %274 = vmatpush2.msra.mxu0 0.0
    %275 = vmatprep.mubr.f32.mxu0 0.0
    %v276 = vand.u32 %v43, 4294901760
    %v277 = vsub.f32 %v43, %v276
    %278 = vmatmul.mubr.f32.gmra.mxu0 %v277
    %v279 = vpop.f32.mrf.mxu0
    %v280 = vadd.f32 %v204, %v279
    %v281 = vpop.f32.mrf.mxu0
    %282 = vdwg.mxu0
    %283 = vmatprep.subr.mxu0 0.0
    %284 = vmatpush1.msra.mxu0 0.0
    %285 = vmatprep.subr.mxu0 0.0
    %286 = vmatpush1.msra.mxu0 0.0
    %287 = vmatprep.subr.mxu0 0.0
    %288 = vmatpush1.msra.mxu0 0.0
    %289 = vmatprep.subr.mxu0 0.0
    %290 = vmatpush1.msra.mxu0 0.0
    %291 = vmatprep.subr.mxu0 0.0
    %292 = vmatpush1.msra.mxu0 0.0
    %293 = vmatprep.subr.mxu0 0.0
    %294 = vmatpush1.msra.mxu0 0.0
    %295 = vmatprep.subr.mxu0 0.0
    %296 = vmatpush1.msra.mxu0 0.0
    %297 = vmatprep.subr.mxu0 0.0
    %298 = vmatpush1.msra.mxu0 0.0
    %299 = vmatprep.subr.mxu0 0.0
    %300 = vmatpush1.msra.mxu0 0.0
    %301 = vmatprep.subr.mxu0 0.0
    %302 = vmatpush1.msra.mxu0 0.0
    %303 = vmatprep.subr.mxu0 0.0
    %304 = vmatpush1.msra.mxu0 0.0
    %305 = vmatprep.subr.mxu0 0.0
    %306 = vmatpush1.msra.mxu0 0.0
    %307 = vmatprep.subr.mxu0 0.0
    %308 = vmatpush1.msra.mxu0 0.0
    %309 = vmatprep.subr.mxu0 0.0
    %310 = vmatpush1.msra.mxu0 0.0
    %311 = vmatprep.subr.mxu0 0.0
    %v312 = vand.u32 %v47, 4294901760
    %313 = vmatpush1.msra.mxu0 %v312
    %314 = vmatprep.subr.mxu0 0.0
    %v315 = vand.u32 %v39, 4294901760
    %316 = vmatpush1.msra.mxu0 %v315
    %317 = vmatprep.subr.mxu0 0.0
    %318 = vmatpush2.msra.mxu0 0.0
    %319 = vmatprep.subr.mxu0 0.0
    %320 = vmatpush2.msra.mxu0 0.0
    %321 = vmatprep.subr.mxu0 0.0
    %322 = vmatpush2.msra.mxu0 0.0
    %323 = vmatprep.subr.mxu0 0.0
    %324 = vmatpush2.msra.mxu0 0.0
    %325 = vmatprep.subr.mxu0 0.0
    %326 = vmatpush2.msra.mxu0 0.0
    %327 = vmatprep.subr.mxu0 0.0
    %328 = vmatpush2.msra.mxu0 0.0
    %329 = vmatprep.subr.mxu0 0.0
    %330 = vmatpush2.msra.mxu0 0.0
    %331 = vmatprep.subr.mxu0 0.0
    %332 = vmatpush2.msra.mxu0 0.0
    %333 = vmatprep.subr.mxu0 0.0
    %334 = vmatpush2.msra.mxu0 0.0
    %335 = vmatprep.subr.mxu0 0.0
    %336 = vmatpush2.msra.mxu0 0.0
    %337 = vmatprep.subr.mxu0 0.0
    %338 = vmatpush2.msra.mxu0 0.0
    %339 = vmatprep.subr.mxu0 0.0
    %340 = vmatpush2.msra.mxu0 0.0
    %341 = vmatprep.subr.mxu0 0.0
    %342 = vmatpush2.msra.mxu0 0.0
    %343 = vmatprep.subr.mxu0 0.0
    %344 = vmatpush2.msra.mxu0 0.0
    %345 = vmatprep.subr.mxu0 0.0
    %346 = vmatpush2.msra.mxu0 0.0
    %347 = vmatprep.subr.mxu0 0.0
    %348 = vmatpush2.msra.mxu0 0.0
    %349 = vmatprep.mubr.f32.mxu0 0.0
    %v350 = vand.u32 %v43, 4294901760
    %v351 = vsub.f32 %v43, %v350
    %v352 = vand.u32 %v351, 4294901760
    %353 = vmatmul.mubr.f32.gmra.mxu0 %v352
    %v354 = vpop.f32.mrf.mxu0
    %v355 = vadd.f32 %v280, %v354
    %v356 = vpop.f32.mrf.mxu0
    %357 = vdwg.mxu0
    %358 = vmatprep.subr.mxu0 0.0
    %359 = vmatpush1.msra.mxu0 0.0
    %360 = vmatprep.subr.mxu0 0.0
    %361 = vmatpush1.msra.mxu0 0.0
    %362 = vmatprep.subr.mxu0 0.0
    %363 = vmatpush1.msra.mxu0 0.0
    %364 = vmatprep.subr.mxu0 0.0
    %365 = vmatpush1.msra.mxu0 0.0
    %366 = vmatprep.subr.mxu0 0.0
    %367 = vmatpush1.msra.mxu0 0.0
    %368 = vmatprep.subr.mxu0 0.0
    %369 = vmatpush1.msra.mxu0 0.0
    %370 = vmatprep.subr.mxu0 0.0
    %371 = vmatpush1.msra.mxu0 0.0
    %372 = vmatprep.subr.mxu0 0.0
    %373 = vmatpush1.msra.mxu0 0.0
    %374 = vmatprep.subr.mxu0 0.0
    %375 = vmatpush1.msra.mxu0 0.0
    %376 = vmatprep.subr.mxu0 0.0
    %377 = vmatpush1.msra.mxu0 0.0
    %378 = vmatprep.subr.mxu0 0.0
    %379 = vmatpush1.msra.mxu0 0.0
    %380 = vmatprep.subr.mxu0 0.0
    %381 = vmatpush1.msra.mxu0 0.0
    %382 = vmatprep.subr.mxu0 0.0
    %383 = vmatpush1.msra.mxu0 0.0
    %384 = vmatprep.subr.mxu0 0.0
    %385 = vmatpush1.msra.mxu0 0.0
    %386 = vmatprep.subr.mxu0 0.0
    %v387 = vand.u32 %v47, 4294901760
    %v388 = vsub.f32 %v47, %v387
    %v389 = vand.u32 %v388, 4294901760
    %390 = vmatpush1.msra.mxu0 %v389
    %391 = vmatprep.subr.mxu0 0.0
    %v392 = vand.u32 %v39, 4294901760
    %v393 = vsub.f32 %v39, %v392
    %v394 = vand.u32 %v393, 4294901760
    %395 = vmatpush1.msra.mxu0 %v394
    %396 = vmatprep.subr.mxu0 0.0
    %397 = vmatpush2.msra.mxu0 0.0
    %398 = vmatprep.subr.mxu0 0.0
    %399 = vmatpush2.msra.mxu0 0.0
    %400 = vmatprep.subr.mxu0 0.0
    %401 = vmatpush2.msra.mxu0 0.0
    %402 = vmatprep.subr.mxu0 0.0
    %403 = vmatpush2.msra.mxu0 0.0
    %404 = vmatprep.subr.mxu0 0.0
    %405 = vmatpush2.msra.mxu0 0.0
    %406 = vmatprep.subr.mxu0 0.0
    %407 = vmatpush2.msra.mxu0 0.0
    %408 = vmatprep.subr.mxu0 0.0
    %409 = vmatpush2.msra.mxu0 0.0
    %410 = vmatprep.subr.mxu0 0.0
    %411 = vmatpush2.msra.mxu0 0.0
    %412 = vmatprep.subr.mxu0 0.0
    %413 = vmatpush2.msra.mxu0 0.0
    %414 = vmatprep.subr.mxu0 0.0
    %415 = vmatpush2.msra.mxu0 0.0
    %416 = vmatprep.subr.mxu0 0.0
    %417 = vmatpush2.msra.mxu0 0.0
    %418 = vmatprep.subr.mxu0 0.0
    %419 = vmatpush2.msra.mxu0 0.0
    %420 = vmatprep.subr.mxu0 0.0
    %421 = vmatpush2.msra.mxu0 0.0
    %422 = vmatprep.subr.mxu0 0.0
    %423 = vmatpush2.msra.mxu0 0.0
    %424 = vmatprep.subr.mxu0 0.0
    %425 = vmatpush2.msra.mxu0 0.0
    %426 = vmatprep.subr.mxu0 0.0
    %427 = vmatpush2.msra.mxu0 0.0
    %428 = vmatprep.mubr.f32.mxu0 0.0
    %v429 = vand.u32 %v43, 4294901760
    %430 = vmatmul.mubr.f32.gmra.mxu0 %v429
    %v431 = vpop.f32.mrf.mxu0
    %v432 = vadd.f32 %v355, %v431
    %v433 = vpop.f32.mrf.mxu0
    %434 = vdwg.mxu0
    %435 = vmatprep.subr.mxu0 0.0
    %436 = vmatpush1.msra.mxu0 0.0
    %437 = vmatprep.subr.mxu0 0.0
    %438 = vmatpush1.msra.mxu0 0.0
    %439 = vmatprep.subr.mxu0 0.0
    %440 = vmatpush1.msra.mxu0 0.0
    %441 = vmatprep.subr.mxu0 0.0
    %442 = vmatpush1.msra.mxu0 0.0
    %443 = vmatprep.subr.mxu0 0.0
    %444 = vmatpush1.msra.mxu0 0.0
    %445 = vmatprep.subr.mxu0 0.0
    %446 = vmatpush1.msra.mxu0 0.0
    %447 = vmatprep.subr.mxu0 0.0
    %448 = vmatpush1.msra.mxu0 0.0
    %449 = vmatprep.subr.mxu0 0.0
    %450 = vmatpush1.msra.mxu0 0.0
    %451 = vmatprep.subr.mxu0 0.0
    %452 = vmatpush1.msra.mxu0 0.0
    %453 = vmatprep.subr.mxu0 0.0
    %454 = vmatpush1.msra.mxu0 0.0
    %455 = vmatprep.subr.mxu0 0.0
    %456 = vmatpush1.msra.mxu0 0.0
    %457 = vmatprep.subr.mxu0 0.0
    %458 = vmatpush1.msra.mxu0 0.0
    %459 = vmatprep.subr.mxu0 0.0
    %460 = vmatpush1.msra.mxu0 0.0
    %461 = vmatprep.subr.mxu0 0.0
    %462 = vmatpush1.msra.mxu0 0.0
    %463 = vmatprep.subr.mxu0 0.0
    %v464 = vand.u32 %v47, 4294901760
    %465 = vmatpush1.msra.mxu0 %v464
    %466 = vmatprep.subr.mxu0 0.0
    %v467 = vand.u32 %v39, 4294901760
    %468 = vmatpush1.msra.mxu0 %v467
    %469 = vmatprep.subr.mxu0 0.0
    %470 = vmatpush2.msra.mxu0 0.0
    %471 = vmatprep.subr.mxu0 0.0
    %472 = vmatpush2.msra.mxu0 0.0
    %473 = vmatprep.subr.mxu0 0.0
    %474 = vmatpush2.msra.mxu0 0.0
    %475 = vmatprep.subr.mxu0 0.0
    %476 = vmatpush2.msra.mxu0 0.0
    %477 = vmatprep.subr.mxu0 0.0
    %478 = vmatpush2.msra.mxu0 0.0
    %479 = vmatprep.subr.mxu0 0.0
    %480 = vmatpush2.msra.mxu0 0.0
    %481 = vmatprep.subr.mxu0 0.0
    %482 = vmatpush2.msra.mxu0 0.0
    %483 = vmatprep.subr.mxu0 0.0
    %484 = vmatpush2.msra.mxu0 0.0
    %485 = vmatprep.subr.mxu0 0.0
    %486 = vmatpush2.msra.mxu0 0.0
    %487 = vmatprep.subr.mxu0 0.0
    %488 = vmatpush2.msra.mxu0 0.0
    %489 = vmatprep.subr.mxu0 0.0
    %490 = vmatpush2.msra.mxu0 0.0
    %491 = vmatprep.subr.mxu0 0.0
    %492 = vmatpush2.msra.mxu0 0.0
    %493 = vmatprep.subr.mxu0 0.0
    %494 = vmatpush2.msra.mxu0 0.0
    %495 = vmatprep.subr.mxu0 0.0
    %496 = vmatpush2.msra.mxu0 0.0
    %497 = vmatprep.subr.mxu0 0.0
    %498 = vmatpush2.msra.mxu0 0.0
    %499 = vmatprep.subr.mxu0 0.0
    %500 = vmatpush2.msra.mxu0 0.0
    %501 = vmatprep.mubr.f32.mxu0 0.0
    %v502 = vand.u32 %v43, 4294901760
    %503 = vmatmul.mubr.f32.gmra.mxu0 %v502
    %v504 = vpop.f32.mrf.mxu0
    %v505 = vadd.f32 %v432, %v504
    %v506 = vpop.f32.mrf.mxu0
    %507 = vdwg.mxu0
    %vm508 = vcmask 261120
    %509 = vst.msk [vmem:[#allocation5] sm:$0xff] %vm508, %v505
    // Predicated region
    $region14: #{tpu_custom_call.1} parent=1 // pred_check
      _
    $region15: #{tpu_custom_call.1} parent=1 // pred_check_branch
      %511 = sbr.rel (0) target = $region17
    $region16: #{tpu_custom_call.1} parent=1 // pred_region
      %s513 = ssub.s32 128, 128
      %514 = vsyncadd [#allocation4], %s513
      %s516 = sshll.u32 [#allocation5], 4
      %s517 = int_to_ptr.vmem [resolvable:$true] %s516
      %519 = dma.vmem_to_hbm [thread:$0]  %s517, 128, %s2, [#allocation4]
    $region17: #{tpu_custom_call.1} parent=1 // pred_fallthru
      _
    // Predicated region
    $region18: #{tpu_custom_call.1} parent=1 // pred_check
      _
    $region19: #{tpu_custom_call.1} parent=1 // pred_check_branch
      %521 = sbr.rel (0) target = $region21
    $region20: #{tpu_custom_call.1} parent=1 // pred_region
      %522 = dma.done [#allocation4], 128
    $region21: #{tpu_custom_call.1} parent=1 // pred_fallthru
      _
    %523 = vsyncpa [#allocation3], 1
    %524 = vsyncpa [#allocation4], 1

</llo_original>
